<compile_context>
chip_gen: v5e
topology: v5e:2x2
jax: 0.10.0
libtpu: 0.0.40
codegen_flags: <defaults>
</compile_context>

<pallas_src>
import functools

import jax
import jax.numpy as jnp
from jax import lax
from jax.experimental import pallas as pl
from jax.experimental.pallas import tpu as pltpu


def _round_up(n, m):
    return ((n + m - 1) // m) * m


def _mlp_kernel(x_ref, w1_ref, b1_ref, w2_ref, b2_ref, o_ref, *,
                chunk, n_chunks, hidden_dtype):
    # x_ref : (n_in, TB)        batch on lanes (lane-dense)
    # w1_ref: (n_hidden, n_in)  VMEM-resident (constant index_map)
    # b1_ref: (n_hidden, 1)     VMEM-resident
    # w2_ref: (n_hidden, 1)     VMEM-resident
    # b2_ref: (1, 1)            scalar in SMEM
    # o_ref : (1, TB)           lane-dense output tile
    w1 = w1_ref[...]
    b1 = b1_ref[...]
    w2 = w2_ref[...]
    b2 = b2_ref[0, 0]

    def body(c, carry):
        start = pl.multiple_of(c * chunk, 128)
        xc = x_ref[:, pl.ds(start, chunk)]                          # (n_in, chunk)
        # Layer 1: tiny-K matmul, f32 accumulation (MXU; far off crit path).
        h = jnp.dot(w1, xc, preferred_element_type=jnp.float32) + b1
        # Tanh is the binding EUP op; optionally run it in bf16 (v6e/v7x ~2x).
        t = jnp.tanh(h.astype(hidden_dtype))
        # Layer 2 (output width 1): VPU multiply + XLU sublane reduce in f32 —
        # no 1-wide MXU pass, and the VPU/XLU slots have slack while EUP-bound.
        y = jnp.sum(t.astype(jnp.float32) * w2, axis=0, keepdims=True) + b2
        o_ref[:, pl.ds(start, chunk)] = y.astype(o_ref.dtype)
        return carry

    lax.fori_loop(0, n_chunks, body, 0, unroll=(n_chunks <= 16))


@functools.partial(jax.jit,
                   static_argnames=("block_b", "hidden_dtype", "x_transposed"))
def regression_network_forward(x, w1, b1, w2, b2, *, block_b=8192,
                               hidden_dtype=jnp.float32, x_transposed=False):
    """Fused forward pass of RegressionNetwork.

    x : (B, n_inputs) float32, or (n_inputs, B) if x_transposed=True.
    w1: (n_inputs, n_hidden), b1: (1, n_hidden)   (pre-transposed vs PyTorch)
    w2: (n_hidden, 1),        b2: (1, 1)
    returns: (B, 1) float32
    """
    if x_transposed:
        n_in, B = x.shape
    else:
        B, n_in = x.shape
    n_hidden = w1.shape[1]

    # --- balanced, lane-aligned batch tiling --------------------------------
    block_b = _round_up(max(int(block_b), 128), 128)   # keep blocks lane-aligned
    n_tiles = pl.cdiv(B, block_b)
    if n_tiles == 1 and B >= 256:
        n_tiles = 2                                    # feed both v7x TensorCores
    tb = _round_up(pl.cdiv(B, n_tiles), 128)
    b_pad = tb * n_tiles

    # In-kernel lane chunk: largest of (512, 384, 256, 128) that divides tb.
    if tb <= 512:
        chunk = tb
    else:
        chunk = next(c for c in (512, 384, 256, 128) if tb % c == 0)
    n_chunks = tb // chunk

    # --- layout plumbing (fused by XLA inside this jit, no extra HBM pass) --
    if x_transposed:
        xT = jnp.pad(x.astype(jnp.float32), ((0, 0), (0, b_pad - B)))
    else:
        xT = jnp.pad(x.astype(jnp.float32), ((0, b_pad - B), (0, 0))).T
    w1T = w1.T.astype(jnp.float32)                              # (n_hidden, n_in)
    b1c = jnp.reshape(b1, (n_hidden, 1)).astype(jnp.float32)    # (n_hidden, 1)
    w2c = jnp.reshape(w2, (n_hidden, 1)).astype(jnp.float32)    # (n_hidden, 1)
    b2s = jnp.reshape(b2, (1, 1)).astype(jnp.float32)           # (1, 1) -> SMEM

    kernel = functools.partial(_mlp_kernel, chunk=chunk, n_chunks=n_chunks,
                               hidden_dtype=hidden_dtype)

    cost = pl.CostEstimate(
        flops=2 * b_pad * n_in * n_hidden + 2 * b_pad * n_hidden,
        transcendentals=b_pad * n_hidden,
        bytes_accessed=4 * (b_pad * (n_in + 1) + n_hidden * (n_in + 2) + 1),
    )

    out_pad = pl.pallas_call(
        kernel,
        out_shape=jax.ShapeDtypeStruct((1, b_pad), jnp.float32),
        grid=(n_tiles,),
        in_specs=[
            pl.BlockSpec((n_in, tb), lambda i: (0, i)),            # x: batch-tiled
            pl.BlockSpec((n_hidden, n_in), lambda i: (0, 0)),      # w1: resident
            pl.BlockSpec((n_hidden, 1), lambda i: (0, 0)),         # b1: resident
            pl.BlockSpec((n_hidden, 1), lambda i: (0, 0)),         # w2: resident
            pl.BlockSpec(memory_space=pltpu.MemorySpace.SMEM),     # b2: SMEM scalar
        ],
        out_specs=pl.BlockSpec((1, tb), lambda i: (0, i)),
        compiler_params=pltpu.CompilerParams(
            dimension_semantics=("parallel",),
        ),
        cost_estimate=cost,
    )(xT, w1T, b1c, w2c, b2s)

    # Back to the caller's (B, 1) convention; drop batch padding.
    return out_pad[:, :B].T


if __name__ == "__main__":
    # Module hyperparameters (small, consistent with the forward pass).
    n_inputs = 4
    n_hidden = 32
    batch = 8

    key = jax.random.PRNGKey(0)
    kx, kw1, kb1, kw2, kb2 = jax.random.split(key, 5)

    x = jax.random.normal(kx, (batch, n_inputs), dtype=jnp.float32)
    w1 = 0.1 * jax.random.normal(kw1, (n_inputs, n_hidden), dtype=jnp.float32)
    b1 = 0.1 * jax.random.normal(kb1, (1, n_hidden), dtype=jnp.float32)
    w2 = 0.1 * jax.random.normal(kw2, (n_hidden, 1), dtype=jnp.float32)
    b2 = 0.1 * jax.random.normal(kb2, (1, 1), dtype=jnp.float32)

    # 1) Small batch, exact-f32 path: must match the PyTorch semantics tightly.
    out = jax.block_until_ready(regression_network_forward(x, w1, b1, w2, b2))
    ref = jnp.tanh(x @ w1 + b1) @ w2 + b2
    assert out.shape == (batch, 1)
    assert jnp.allclose(out, ref, atol=1e-5, rtol=1e-5)

    # 2) Non-aligned mid-size batch with the default block: exercises the
    #    >=2-tile split (both v7x cores), balanced tiling (<128 pad cols) and
    #    the multi-chunk in-kernel loop (tb=1536 -> 3 chunks of 512).
    batch2 = 3000
    x2 = jax.random.normal(kx, (batch2, n_inputs), dtype=jnp.float32)
    out2 = jax.block_until_ready(regression_network_forward(x2, w1, b1, w2, b2))
    ref2 = jnp.tanh(x2 @ w1 + b1) @ w2 + b2
    assert out2.shape == (batch2, 1)
    assert jnp.allclose(out2, ref2, atol=1e-5, rtol=1e-5)

    # 3) bf16 hidden-chain fast path (v6e/v7x EUP ~2x) with a caller-provided
    #    transposed x (no wrapper-side transpose at all), multi-tile grid.
    #    Relaxed tolerance is the accepted precision/perf tradeoff.
    batch3 = 1000
    x3 = jax.random.normal(kx, (batch3, n_inputs), dtype=jnp.float32)
    out3 = jax.block_until_ready(
        regression_network_forward(x3.T, w1, b1, w2, b2, block_b=256,
                                   hidden_dtype=jnp.bfloat16, x_transposed=True)
    )
    ref3 = jnp.tanh(x3 @ w1 + b1) @ w2 + b2
    assert out3.shape == (batch3, 1)
    assert jnp.allclose(out3, ref3, atol=1e-2, rtol=1e-2)

    print("KERNEL_OK")
</pallas_src>

<mosaic_0001>
module attributes {stable_mosaic.version = 11 : i64} {
  func.func @_mlp_kernel(%arg0: i32, %arg1: memref<4x128xf32, #tpu.memory_space<vmem>>, %arg2: memref<32x4xf32, #tpu.memory_space<vmem>>, %arg3: memref<32x1xf32, #tpu.memory_space<vmem>>, %arg4: memref<32x1xf32, #tpu.memory_space<vmem>>, %arg5: memref<1x1xf32, #tpu.memory_space<smem>>, %arg6: memref<1x128xf32, #tpu.memory_space<vmem>>) attributes {dimension_semantics = [#tpu.dimension_semantics<parallel>], iteration_bounds = array<i64: 1>, scalar_prefetch = 0 : i64, scratch_operands = 0 : i64, tpu.core_type = #tpu.core_type<tc>, window_params = [{transform_indices = @transform_0, window_bounds = array<i64: 4, 128>}, {pipeline_mode = #tpu.pipeline_mode<synchronous>, transform_indices = @transform_1, window_bounds = array<i64: 32, 4>}, {pipeline_mode = #tpu.pipeline_mode<synchronous>, transform_indices = @transform_2, window_bounds = array<i64: 32, 1>}, {pipeline_mode = #tpu.pipeline_mode<synchronous>, transform_indices = @transform_3, window_bounds = array<i64: 32, 1>}, {transform_indices = @transform_4, window_bounds = array<i64: 1, 1>}, {transform_indices = @transform_5, window_bounds = array<i64: 1, 128>}]} {
    %c0 = arith.constant 0 : index
    %c0_0 = arith.constant 0 : index
    %0 = vector.load %arg2[%c0, %c0_0] : memref<32x4xf32, #tpu.memory_space<vmem>>, vector<32x4xf32>
    %c0_1 = arith.constant 0 : index
    %c0_2 = arith.constant 0 : index
    %1 = vector.load %arg3[%c0_1, %c0_2] : memref<32x1xf32, #tpu.memory_space<vmem>>, vector<32x1xf32>
    %c0_3 = arith.constant 0 : index
    %c0_4 = arith.constant 0 : index
    %2 = vector.load %arg4[%c0_3, %c0_4] : memref<32x1xf32, #tpu.memory_space<vmem>>, vector<32x1xf32>
    %c0_5 = arith.constant 0 : index
    %c0_6 = arith.constant 0 : index
    %3 = memref.load %arg5[%c0_5, %c0_6] : memref<1x1xf32, #tpu.memory_space<smem>>
    %c0_i32 = arith.constant 0 : i32
    %c128_i32 = arith.constant 128 : i32
    %4 = arith.muli %c0_i32, %c128_i32 : i32
    %5 = tpu.assume_multiple %4, 128 : i32
    %c0_7 = arith.constant 0 : index
    %6 = arith.index_cast %5 : i32 to index
    %7 = vector.load %arg1[%c0_7, %6] : memref<4x128xf32, #tpu.memory_space<vmem>>, vector<4x128xf32>
    %cst = arith.constant dense<0.000000e+00> : vector<32x128xf32>
    %8 = tpu.matmul %0, %7, %cst {dimension_numbers = #tpu.dot_dimension_numbers<[1], [0], [0], [1], [0, 0, 1, 1], [], []>} : vector<32x4xf32>, vector<4x128xf32>, vector<32x128xf32> -> vector<32x128xf32>
    %9 = vector.broadcast %1 : vector<32x1xf32> to vector<32x128xf32>
    %10 = arith.addf %8, %9 : vector<32x128xf32>
    %11 = math.tanh %10 : vector<32x128xf32>
    %12 = vector.broadcast %2 : vector<32x1xf32> to vector<32x128xf32>
    %13 = arith.mulf %11, %12 : vector<32x128xf32>
    %cst_8 = arith.constant dense<0.000000e+00> : vector<128xf32>
    %14 = vector.multi_reduction <add>, %13, %cst_8 [0] : vector<32x128xf32> to vector<128xf32>
    %15 = vector.shape_cast %14 : vector<128xf32> to vector<1x128xf32>
    %16 = vector.broadcast %3 : f32 to vector<1x128xf32>
    %17 = arith.addf %15, %16 : vector<1x128xf32>
    %c0_9 = arith.constant 0 : index
    %18 = arith.index_cast %5 : i32 to index
    %19 = vector.load %arg6[%c0_9, %18] : memref<1x128xf32, #tpu.memory_space<vmem>>, vector<1x128xf32>
    tpu.vector_store %arg6[%c0_9, %18], %17 {strides = array<i32>} : memref<1x128xf32, #tpu.memory_space<vmem>>, vector<1x128xf32>,
    %c1_i32 = arith.constant 1 : i32
    return
  }
  func.func @transform_0(%arg0: i32) -> (i32, i32) {
    %c0_i32 = arith.constant 0 : i32
    %c0_i32_0 = arith.constant 0 : i32
    return %c0_i32, %arg0 : i32, i32
  }
  func.func @transform_1(%arg0: i32) -> (i32, i32) {
    %c0_i32 = arith.constant 0 : i32
    %c0_i32_0 = arith.constant 0 : i32
    %c0_i32_1 = arith.constant 0 : i32
    return %c0_i32, %c0_i32_0 : i32, i32
  }
  func.func @transform_2(%arg0: i32) -> (i32, i32) {
    %c0_i32 = arith.constant 0 : i32
    %c0_i32_0 = arith.constant 0 : i32
    %c0_i32_1 = arith.constant 0 : i32
    return %c0_i32, %c0_i32_0 : i32, i32
  }
  func.func @transform_3(%arg0: i32) -> (i32, i32) {
    %c0_i32 = arith.constant 0 : i32
    %c0_i32_0 = arith.constant 0 : i32
    %c0_i32_1 = arith.constant 0 : i32
    return %c0_i32, %c0_i32_0 : i32, i32
  }
  func.func @transform_4(%arg0: i32) -> (i32, i32) {
    %c0_i32 = arith.constant 0 : i32
    %c0_i32_0 = arith.constant 0 : i32
    %c0_i32_1 = arith.constant 0 : i32
    return %c0_i32, %c0_i32_0 : i32, i32
  }
  func.func @transform_5(%arg0: i32) -> (i32, i32) {
    %c0_i32 = arith.constant 0 : i32
    %c0_i32_0 = arith.constant 0 : i32
    return %c0_i32, %arg0 : i32, i32
  }
}

</mosaic_0001>

<llo_original>
// kernel: regression_network_forward.1
$region0: #{regression_network_forward.1}
  #allocation0 [shape = 'u32[]', space=smem, size = 0x4, offset = 0x4, fixed_abs, tag = 'smem constant byte address 0x4 - core index']
  #allocation1 [shape = 'u32[72,128]{1,0:T(1,128)}', space=vmem, size = 0x9000, scoped, tag = 'internal scratch']
  #allocation2 [shape = 'f32[1,1]{1,0:T(1,128)S(6)}', space=smem, size = 0x200, scoped, tag = 'scoped memory for regression_network_forward.1']
  %s0 = inlined_call_operand.vmem [shape: f32[4,128], index: 0, kind: input, shape index: {}]
  %s1 = inlined_call_operand.vmem [shape: f32[32,4], index: 1, kind: input, shape index: {}]
  %s2 = inlined_call_operand.vmem [shape: f32[32,1], index: 2, kind: input, shape index: {}]
  %s3 = inlined_call_operand.vmem [shape: f32[32,1], index: 3, kind: input, shape index: {}]
  %s4 = inlined_call_operand.<no memory space> [shape: f32[1,1], index: 4, kind: input, shape index: {}]
  %s5 = inlined_call_operand.vmem [shape: f32[1,128], index: 5, kind: output, shape index: {}]
  %s6 = sld [smem:[#allocation0]]
  $region30: #{regression_network_forward.1} parent=0
    _
  %s8 = ssub.s32 1, %s6
  %s9 = scalar_select 0, %s8, %s6
  %10 = sst [smem:[#allocation2]] %s4
  // Predicated region
  $region2: #{regression_network_forward.1} parent=0 // pred_check
    _
  $region3: #{regression_network_forward.1} parent=0 // pred_check_branch
    %12 = sbr.rel (0) target = $region5
  $region4: #{regression_network_forward.1} parent=0 // pred_region
    _
  $region5: #{regression_network_forward.1} parent=0 // pred_fallthru
    _
  // Predicated region
  $region6: #{regression_network_forward.1} parent=0 // pred_check
    _
  $region7: #{regression_network_forward.1} parent=0 // pred_check_branch
    %14 = sbr.rel (0) target = $region9
  $region8: #{regression_network_forward.1} parent=0 // pred_region
    _
  $region9: #{regression_network_forward.1} parent=0 // pred_fallthru
    _
  // Predicated region
  $region10: #{regression_network_forward.1} parent=0 // pred_check
    _
  $region11: #{regression_network_forward.1} parent=0 // pred_check_branch
    %16 = sbr.rel (0) target = $region13
  $region12: #{regression_network_forward.1} parent=0 // pred_region
    _
  $region13: #{regression_network_forward.1} parent=0 // pred_fallthru
    _
  // Predicated region
  $region14: #{regression_network_forward.1} parent=0 // pred_check
    _
  $region15: #{regression_network_forward.1} parent=0 // pred_check_branch
    %18 = sbr.rel (0) target = $region17
  $region16: #{regression_network_forward.1} parent=0 // pred_region
    _
  $region17: #{regression_network_forward.1} parent=0 // pred_fallthru
    _
  // Predicated region
  $region18: #{regression_network_forward.1} parent=0 // pred_check
    _
  $region19: #{regression_network_forward.1} parent=0 // pred_check_branch
    %20 = sbr.rel (0) target = $region21
  $region20: #{regression_network_forward.1} parent=0 // pred_region
    _
  $region21: #{regression_network_forward.1} parent=0 // pred_fallthru
    _
  %v21 = vld [vmem:[%s1] sm:$0xff]
  %v22 = vld [vmem:[%s1 + $0x8] sm:$0xff]
  %v23 = vld [vmem:[%s1 + $0x10] sm:$0xff]
  %v24 = vld [vmem:[%s1 + $0x18] sm:$0xff]
  %v25 = vld [vmem:[%s2] sm:$0xff]
  %v26 = vld [vmem:[%s2 + $0x8] sm:$0xff]
  %v27 = vld [vmem:[%s2 + $0x10] sm:$0xff]
  %v28 = vld [vmem:[%s2 + $0x18] sm:$0xff]
  %v29 = vld [vmem:[%s3] sm:$0xff]
  %v30 = vld [vmem:[%s3 + $0x8] sm:$0xff]
  %v31 = vld [vmem:[%s3 + $0x10] sm:$0xff]
  %v32 = vld [vmem:[%s3 + $0x18] sm:$0xff]
  %s33 = sld [smem:[#allocation2]]
  %v34 = vld [vmem:[%s0] sm:$0xf]
  %36 = vset.pattern.permute.xlu0 0
  %37 = vperm.xlu0 %36, %v25
  %v38 = vpop.permute.xlu0 %37
  %41 = vset.pattern.permute.xlu0 0
  %42 = vperm.xlu0 %41, %v26
  %v43 = vpop.permute.xlu0 %42
  %46 = vset.pattern.permute.xlu0 0
  %47 = vperm.xlu0 %46, %v27
  %v48 = vpop.permute.xlu0 %47
  %51 = vset.pattern.permute.xlu0 0
  %52 = vperm.xlu0 %51, %v28
  %v53 = vpop.permute.xlu0 %52
  %vm55 = vcmask 31744
  %v57 = vsel %vm55, %v21, 0
  %v60 = vsel %vm55, %v22, 0
  %v63 = vsel %vm55, %v23, 0
  %v66 = vsel %vm55, %v24, 0
  %vm68 = vcmask 1043456
  %v70 = vsel %vm68, %v34, 0
  %72 = vmatpush.msra.mxu0 0.0
  %73 = vmatpush.msra.mxu0 0.0
  %74 = vmatpush.msra.mxu0 0.0
  %75 = vmatpush.msra.mxu0 0.0
  %76 = vmatpush.msra.mxu0 0.0
  %77 = vmatpush.msra.mxu0 0.0
  %78 = vmatpush.msra.mxu0 0.0
  %79 = vmatpush.msra.mxu0 0.0
  %80 = vmatpush.msra.mxu0 0.0
  %81 = vmatpush.msra.mxu0 0.0
  %82 = vmatpush.msra.mxu0 0.0
  %83 = vmatpush.msra.mxu0 0.0
  %84 = vmatpush.msra.mxu0 0.0
  %85 = vmatpush.msra.mxu0 0.0
  %86 = vmatpush.msra.mxu0 0.0
  %87 = vmatpush.msra.mxu0 %v70
  %88 = vmatmul.f32.gmra.mxu0 %v57
  %v89 = vpop.f32.mrf.mxu0
  %v90 = vadd.f32 %v38, %v89
  %91 = vmatmul.f32.gmra.mxu0 %v60
  %v92 = vpop.f32.mrf.mxu0
  %v93 = vadd.f32 %v43, %v92
  %94 = vmatmul.f32.gmra.mxu0 %v63
  %v95 = vpop.f32.mrf.mxu0
  %v96 = vadd.f32 %v48, %v95
  %97 = vmatmul.f32.gmra.mxu0 %v66
  %v98 = vpop.f32.mrf.mxu0
  %v99 = vadd.f32 %v53, %v98
  %100 = vdwg.mxu0
  %v101 = vtanh.pop %v90
  %v102 = vtanh.pop %v93
  %v103 = vtanh.pop %v96
  %v104 = vtanh.pop %v99
  %106 = vset.pattern.permute.xlu0 0
  %107 = vperm.xlu0 %106, %v29
  %v108 = vpop.permute.xlu0 %107
  %111 = vset.pattern.permute.xlu0 0
  %112 = vperm.xlu0 %111, %v30
  %v113 = vpop.permute.xlu0 %112
  %116 = vset.pattern.permute.xlu0 0
  %117 = vperm.xlu0 %116, %v31
  %v118 = vpop.permute.xlu0 %117
  %121 = vset.pattern.permute.xlu0 0
  %122 = vperm.xlu0 %121, %v32
  %v123 = vpop.permute.xlu0 %122
  %v125 = vmul.f32 %v101, %v108
  %v126 = vmul.f32 %v102, %v113
  %v127 = vmul.f32 %v103, %v118
  %v128 = vmul.f32 %v104, %v123
  %v129 = vadd.f32 %v125, %v126
  %v130 = vadd.f32 %v129, %v127
  %v131 = vadd.f32 %v130, %v128
  %v132 = vrot.slane %v131, 4
  %v133 = vadd.f32 %v131, %v132
  %v134 = vrot.slane %v133, 2
  %v135 = vadd.f32 %v133, %v134
  %v136 = vrot.slane %v135, 1
  %v137 = vadd.f32 %v135, %v136
  %v138 = vstv %s33
  %v139 = vadd.f32 %v137, %v138
  %140 = vst [vmem:[%s5] sm:$0x1] %v139
  // Predicated region
  $region22: #{regression_network_forward.1} parent=0 // pred_check
    _
  $region23: #{regression_network_forward.1} parent=0 // pred_check_branch
    %142 = sbr.rel (0) target = $region25
  $region24: #{regression_network_forward.1} parent=0 // pred_region
    _
  $region25: #{regression_network_forward.1} parent=0 // pred_fallthru
    _
  // Predicated region
  $region26: #{regression_network_forward.1} parent=0 // pred_check
    _
  $region27: #{regression_network_forward.1} parent=0 // pred_check_branch
    %144 = sbr.rel (0) target = $region29
  $region28: #{regression_network_forward.1} parent=0 // pred_region
    _
  $region29: #{regression_network_forward.1} parent=0 // pred_fallthru
    _

</llo_original>
